<compile_context>
chip_gen: v5e
topology: v5e:2x2
jax: 0.10.0
libtpu: 0.0.40
codegen_flags: <defaults>
</compile_context>

<pallas_src>
import numpy as np
import jax
import jax.numpy as jnp
from jax.experimental import pallas as pl
from jax.experimental.pallas import tpu as pltpu


def _round_up(x, m):
    return ((x + m - 1) // m) * m


# ----------------------------- kernels --------------------------------------


def _matmul_kernel(x_ref, w_ref, o_ref, acc_ref):
    # x_ref: (tm, tk), w_ref: (tk, tn), o_ref: (tm, tn), acc_ref: f32 (tm, tn)
    k = pl.program_id(2)

    @pl.when(k == 0)
    def _():
        acc_ref[...] = jnp.zeros_like(acc_ref)

    acc_ref[...] += jnp.dot(x_ref[...], w_ref[...],
                            preferred_element_type=jnp.float32)

    @pl.when(k == pl.num_programs(2) - 1)
    def _():
        o_ref[...] = acc_ref[...].astype(o_ref.dtype)


def _matmul_bias_kernel(x_ref, w_ref, b_ref, o_ref, acc_ref):
    # Same as above but fuses the bias add into the final K step.
    k = pl.program_id(2)

    @pl.when(k == 0)
    def _():
        acc_ref[...] = jnp.zeros_like(acc_ref)

    acc_ref[...] += jnp.dot(x_ref[...], w_ref[...],
                            preferred_element_type=jnp.float32)

    @pl.when(k == pl.num_programs(2) - 1)
    def _():
        o_ref[...] = (acc_ref[...] + b_ref[...]).astype(o_ref.dtype)


# ----------------------------- wrapper ---------------------------------------


def error_dfa_forward(x, weight_t, bias=None, *, tm=256, tn=256, tk=512):
    """ErrorDFA forward: x @ weight_t (+ bias).

    x:        (B, in_features)  float32
    weight_t: (in_features, out_features)  float32  (pre-transposed weight)
    bias:     optional (out_features,) float32
    """
    M, K = x.shape
    K2, N = weight_t.shape
    assert K == K2, "in_features mismatch"

    # Tile sizes: clip down for small problems; tm keeps 8-sublane alignment,
    # tk/tn keep 128-lane alignment so output stores stay unmasked.
    tm = min(tm, _round_up(M, 8))
    tk = min(tk, _round_up(K, 128))
    tn = min(tn, _round_up(N, 128))
    Mp, Kp, Np = _round_up(M, tm), _round_up(K, tk), _round_up(N, tn)

    xp = x if (Mp == M and Kp == K) else jnp.pad(x, ((0, Mp - M), (0, Kp - K)))
    wp = (weight_t if (Kp == K and Np == N)
          else jnp.pad(weight_t, ((0, Kp - K), (0, Np - N))))

    grid = (Mp // tm, Np // tn, Kp // tk)

    in_specs = [
        pl.BlockSpec((tm, tk), lambda i, j, k: (i, k)),
        pl.BlockSpec((tk, tn), lambda i, j, k: (k, j)),
    ]
    args = [xp, wp]

    if bias is not None:
        bp = bias.astype(jnp.float32).reshape(1, N)
        if Np != N:
            bp = jnp.pad(bp, ((0, 0), (0, Np - N)))
        in_specs.append(pl.BlockSpec((1, tn), lambda i, j, k: (0, j)))
        args.append(bp)
        kernel = _matmul_bias_kernel
    else:
        kernel = _matmul_kernel

    bytes_accessed = 4 * (Mp * Kp + Kp * Np + Mp * Np)
    out = pl.pallas_call(
        kernel,
        out_shape=jax.ShapeDtypeStruct((Mp, Np), jnp.float32),
        grid_spec=pltpu.PrefetchScalarGridSpec(
            num_scalar_prefetch=0,
            grid=grid,
            in_specs=in_specs,
            out_specs=pl.BlockSpec((tm, tn), lambda i, j, k: (i, j)),
            scratch_shapes=[pltpu.VMEM((tm, tn), jnp.float32)],
        ),
        compiler_params=pltpu.CompilerParams(
            # M, N parallel (megacore sharding on v7x), K reduction last.
            dimension_semantics=("parallel", "parallel", "arbitrary"),
            vmem_limit_bytes=32 * 1024 * 1024,
        ),
        cost_estimate=pl.CostEstimate(
            flops=2 * Mp * Np * Kp,
            transcendentals=0,
            bytes_accessed=bytes_accessed,
        ),
    )(*args)

    if Mp != M or Np != N:
        out = out[:M, :N]
    return out


# ----------------------------- module ----------------------------------------


class ErrorDFAPallas:
    """Deterministic re-implementation of ErrorDFA (forward only)."""

    # Below this many MACs a plain XLA dot beats the pallas_call launch cost.
    _PALLAS_MIN_MACS = 1 << 20

    def __init__(self, in_features, out_features, bias=None, key=None):
        if key is None:
            key = jax.random.PRNGKey(0)
        k_w, k_b, k_anchor = jax.random.split(key, 3)

        self.in_features = in_features
        self.out_features = out_features

        # torch.nn.init.kaiming_uniform_ defaults (a=0, fan_in, leaky_relu):
        # bound = sqrt(6 / fan_in), Uniform(-bound, bound).
        bound = float(np.sqrt(6.0 / in_features))
        self.weight = jax.random.uniform(
            k_w, (out_features, in_features), jnp.float32,
            minval=-bound, maxval=bound)
        # One-time transpose outside the kernel: (K, N) layout feeds the MXU
        # K-major with no per-tile transpose.
        self.weight_t = jnp.asarray(self.weight.T)

        if bias:
            self.bias = jax.random.uniform(
                k_b, (out_features,), jnp.float32, minval=-1.0, maxval=1.0)
        else:
            self.bias = None

        # anchor is a non-trainable parameter used only by the DFA backward.
        # TODO(synk): torch stores it as float64; TPU default is f32 — only
        # matters if/when the DFA backward path is implemented for parity.
        self.anchor = jax.random.randint(
            k_anchor, (1, out_features), 1, 256).astype(jnp.float32)
        # TODO(synk): backward pass (DFA random-projection path:
        # complex_gaussian / get_measurements / rand_proj / to_slm) is
        # training-time autograd machinery, not part of the forward kernel.

    def __call__(self, x, *, force_pallas=False):
        M, K = x.shape
        if (not force_pallas) and (M * K * self.out_features
                                   < self._PALLAS_MIN_MACS):
            # Tiny problem: Pallas launch/grid overhead dominates; use XLA.
            out = x @ self.weight_t
            if self.bias is not None:
                out = out + self.bias[None, :]
            return out
        return error_dfa_forward(x, self.weight_t, self.bias)


# ----------------------------- demo / check ----------------------------------

if __name__ == "__main__":
    key = jax.random.PRNGKey(0)
    k_mod, k_mod2, k_x, k_x2 = jax.random.split(key, 4)

    # 1) Small shapes consistent with the module (no bias, module default).
    batch, in_features, out_features = 8, 32, 64
    layer = ErrorDFAPallas(in_features, out_features, bias=None, key=k_mod)
    x = jax.random.normal(k_x, (batch, in_features), jnp.float32)

    out = jax.block_until_ready(
        error_dfa_forward(x, layer.weight_t, layer.bias))

    ref = (np.asarray(x, np.float64) @ np.asarray(layer.weight, np.float64).T)
    np.testing.assert_allclose(np.asarray(out, np.float64), ref,
                               rtol=1e-4, atol=1e-4)

    # 2) Larger, non-tile-aligned shapes with bias: exercises the tiled grid,
    #    K accumulation, zero-padding, and the fused-bias epilogue.
    B2, K2, N2 = 272, 300, 300
    layer2 = ErrorDFAPallas(K2, N2, bias=True, key=k_mod2)
    x2 = jax.random.normal(k_x2, (B2, K2), jnp.float32)

    out2 = jax.block_until_ready(
        error_dfa_forward(x2, layer2.weight_t, layer2.bias))

    ref2 = (np.asarray(x2, np.float64) @ np.asarray(layer2.weight, np.float64).T
            + np.asarray(layer2.bias, np.float64)[None, :])
    np.testing.assert_allclose(np.asarray(out2, np.float64), ref2,
                               rtol=5e-4, atol=5e-4)

    print("KERNEL_OK")
</pallas_src>

<mosaic_0001>
module attributes {stable_mosaic.version = 11 : i64} {
  func.func @_matmul_kernel(%arg0: i32, %arg1: i32, %arg2: i32, %arg3: memref<8x128xf32, #tpu.memory_space<vmem>>, %arg4: memref<128x128xf32, #tpu.memory_space<vmem>>, %arg5: memref<8x128xf32, #tpu.memory_space<vmem>>, %arg6: memref<8x128xf32, #tpu.memory_space<vmem>>) attributes {dimension_semantics = [#tpu.dimension_semantics<parallel>, #tpu.dimension_semantics<parallel>, #tpu.dimension_semantics<arbitrary>], iteration_bounds = array<i64: 1, 1, 1>, scalar_prefetch = 0 : i64, scratch_operands = 1 : i64, tpu.core_type = #tpu.core_type<tc>, window_params = [{transform_indices = @transform_0, window_bounds = array<i64: 8, 128>}, {transform_indices = @transform_1, window_bounds = array<i64: 128, 128>}, {transform_indices = @transform_2, window_bounds = array<i64: 8, 128>}]} {
    %c0_i32 = arith.constant 0 : i32
    %0 = arith.cmpi eq, %arg2, %c0_i32 : i32
    %1 = arith.extui %0 : i1 to i32
    %c0_i32_0 = arith.constant 0 : i32
    %2 = arith.cmpi ne, %1, %c0_i32_0 : i32
    scf.if %2 {
      %cst_10 = arith.constant 0.000000e+00 : f32
      %12 = vector.broadcast %cst_10 : f32 to vector<8x128xf32>
      %c0_11 = arith.constant 0 : index
      %c0_12 = arith.constant 0 : index
      %13 = vector.load %arg6[%c0_11, %c0_12] : memref<8x128xf32, #tpu.memory_space<vmem>>, vector<8x128xf32>
      tpu.vector_store %arg6[%c0_11, %c0_12], %12 {strides = array<i32>} : memref<8x128xf32, #tpu.memory_space<vmem>>, vector<8x128xf32>,
    } else {
    }
    %c0 = arith.constant 0 : index
    %c0_1 = arith.constant 0 : index
    %3 = vector.load %arg6[%c0, %c0_1] : memref<8x128xf32, #tpu.memory_space<vmem>>, vector<8x128xf32>
    %c0_2 = arith.constant 0 : index
    %c0_3 = arith.constant 0 : index
    %4 = vector.load %arg3[%c0_2, %c0_3] : memref<8x128xf32, #tpu.memory_space<vmem>>, vector<8x128xf32>
    %c0_4 = arith.constant 0 : index
    %c0_5 = arith.constant 0 : index
    %5 = vector.load %arg4[%c0_4, %c0_5] : memref<128x128xf32, #tpu.memory_space<vmem>>, vector<128x128xf32>
    %cst = arith.constant dense<0.000000e+00> : vector<8x128xf32>
    %6 = tpu.matmul %4, %5, %cst {dimension_numbers = #tpu.dot_dimension_numbers<[1], [0], [0], [1], [0, 0, 1, 1], [], []>} : vector<8x128xf32>, vector<128x128xf32>, vector<8x128xf32> -> vector<8x128xf32>
    %7 = arith.addf %3, %6 : vector<8x128xf32>
    %c0_6 = arith.constant 0 : index
    %c0_7 = arith.constant 0 : index
    %8 = vector.load %arg6[%c0_6, %c0_7] : memref<8x128xf32, #tpu.memory_space<vmem>>, vector<8x128xf32>
    tpu.vector_store %arg6[%c0_6, %c0_7], %7 {strides = array<i32>} : memref<8x128xf32, #tpu.memory_space<vmem>>, vector<8x128xf32>,
    %c0_i32_8 = arith.constant 0 : i32
    %9 = arith.cmpi eq, %arg2, %c0_i32_8 : i32
    %10 = arith.extui %9 : i1 to i32
    %c0_i32_9 = arith.constant 0 : i32
    %11 = arith.cmpi ne, %10, %c0_i32_9 : i32
    scf.if %11 {
      %c0_10 = arith.constant 0 : index
      %c0_11 = arith.constant 0 : index
      %12 = vector.load %arg6[%c0_10, %c0_11] : memref<8x128xf32, #tpu.memory_space<vmem>>, vector<8x128xf32>
      %c0_12 = arith.constant 0 : index
      %c0_13 = arith.constant 0 : index
      %13 = vector.load %arg5[%c0_12, %c0_13] : memref<8x128xf32, #tpu.memory_space<vmem>>, vector<8x128xf32>
      tpu.vector_store %arg5[%c0_12, %c0_13], %12 {strides = array<i32>} : memref<8x128xf32, #tpu.memory_space<vmem>>, vector<8x128xf32>,
    } else {
    }
    return
  }
  func.func @transform_0(%arg0: i32, %arg1: i32, %arg2: i32) -> (i32, i32) {
    %c0_i32 = arith.constant 0 : i32
    return %arg0, %arg2 : i32, i32
  }
  func.func @transform_1(%arg0: i32, %arg1: i32, %arg2: i32) -> (i32, i32) {
    %c0_i32 = arith.constant 0 : i32
    return %arg2, %arg1 : i32, i32
  }
  func.func @transform_2(%arg0: i32, %arg1: i32, %arg2: i32) -> (i32, i32) {
    %c0_i32 = arith.constant 0 : i32
    return %arg0, %arg1 : i32, i32
  }
}

</mosaic_0001>

<llo_original>
// kernel: tpu_custom_call.1
$region0: #{tpu_custom_call.1}
  #allocation0 [shape = 'u32[]', space=smem, size = 0x4, offset = 0x4, fixed_abs, tag = 'smem constant byte address 0x4 - core index']
  #allocation1 [shape = 'u32[72,128]{1,0:T(1,128)}', space=vmem, size = 0x9000, scoped, tag = 'internal scratch']
  #allocation2 [shape = 'f32[8,128]{1,0:T(8,128)}', space=vmem, size = 0x1000, scoped, tag = 'scratch operand']
  %s0 = inlined_call_operand.hbm [shape: f32[8,128], index: 0, kind: input, shape index: {}]
  %s1 = inlined_call_operand.hbm [shape: f32[128,128], index: 1, kind: input, shape index: {}]
  %s2 = inlined_call_operand.hbm [shape: f32[8,128], index: 2, kind: output, shape index: {}]
  %s3 = sld [smem:[#allocation0]]
  $region34: #{tpu_custom_call.1} parent=0
    _
  %s5 = ssub.s32 1, %s3
  %s6 = scalar_select 0, %s5, %s3
  $region1: #{tpu_custom_call.1} parent=0
    #allocation3 [shape = 'u8[4096]{0}', space=vmem, size = 0x1000, scoped, tag = 'input window, operand 0, single buffered']
    #allocation4 [shape = 's32[1]{0}', space=sflag, size = 0x4, scoped, tag = 'scoped memory for tpu_custom_call.1']
    #allocation5 [shape = 's32[1]{0}', space=sflag, size = 0x4, scoped, tag = 'scoped memory for tpu_custom_call.1']
    #allocation6 [shape = 'u8[65536]{0}', space=vmem, size = 0x10000, scoped, tag = 'input window, operand 1, single buffered']
    #allocation7 [shape = 's32[1]{0}', space=sflag, size = 0x4, scoped, tag = 'scoped memory for tpu_custom_call.1']
    #allocation8 [shape = 'u8[4096]{0}', space=vmem, size = 0x1000, scoped, tag = 'output window, operand 0, single buffered']
    %7 = vsyncpa [#allocation4], 0
    %8 = vsyncpa [#allocation7], 0
    %9 = vsyncpa [#allocation5], 0
    // Predicated region
    $region2: #{tpu_custom_call.1} parent=1 // pred_check
      _
    $region3: #{tpu_custom_call.1} parent=1 // pred_check_branch
      %11 = sbr.rel (0) target = $region5
    $region4: #{tpu_custom_call.1} parent=1 // pred_region
      %13 = vsyncadd [#allocation4], 0
      %s15 = sshll.u32 %s0, 4
      %s16 = int_to_ptr.hbm [resolvable:$true] %s15
      %s17 = sshll.u32 [#allocation3], 4
      %s18 = int_to_ptr.vmem [resolvable:$true] %s17
      %20 = dma.hbm_to_vmem [thread:$0]  %s16, 128, %s18, [#allocation4]
    $region5: #{tpu_custom_call.1} parent=1 // pred_fallthru
      _
    // Predicated region
    $region6: #{tpu_custom_call.1} parent=1 // pred_check
      _
    $region7: #{tpu_custom_call.1} parent=1 // pred_check_branch
      %22 = sbr.rel (0) target = $region9
    $region8: #{tpu_custom_call.1} parent=1 // pred_region
      %24 = vsyncadd [#allocation7], 0
      %s25 = sshll.u32 %s1, 4
      %s26 = int_to_ptr.hbm [resolvable:$true] %s25
      %s27 = sshll.u32 [#allocation6], 4
      %s28 = int_to_ptr.vmem [resolvable:$true] %s27
      %33 = dma.hbm_to_vmem [thread:$0]  %s26, 2048, %s28, [#allocation7], 128, 128, 8
    $region9: #{tpu_custom_call.1} parent=1 // pred_fallthru
      _
    // Predicated region
    $region10: #{tpu_custom_call.1} parent=1 // pred_check
      _
    $region11: #{tpu_custom_call.1} parent=1 // pred_check_branch
      %35 = sbr.rel (0) target = $region13
    $region12: #{tpu_custom_call.1} parent=1 // pred_region
      %37 = dma.done [#allocation4], 128
    $region13: #{tpu_custom_call.1} parent=1 // pred_fallthru
      _
    // Predicated region
    $region14: #{tpu_custom_call.1} parent=1 // pred_check
      _
    $region15: #{tpu_custom_call.1} parent=1 // pred_check_branch
      %39 = sbr.rel (0) target = $region17
    $region16: #{tpu_custom_call.1} parent=1 // pred_region
      %41 = dma.done [#allocation7], 2048
    $region17: #{tpu_custom_call.1} parent=1 // pred_fallthru
      _
    %p42 = scmp.eq.s32.totalorder 0, 0
    // Predicated region
    $region18: #{tpu_custom_call.1} parent=1 // pred_check
      %p43 = pneg %p42
    $region19: #{tpu_custom_call.1} parent=1 // pred_check_branch
      %45 = sbr.rel (%p43) target = $region21
    $region20: #{tpu_custom_call.1} parent=1 // pred_region
      %46 = vst [vmem:[#allocation2] sm:$0xff] 0.0
    $region21: #{tpu_custom_call.1} parent=1 // pred_fallthru
      _
    %v47 = vld [vmem:[#allocation2] sm:$0xff]
    %v48 = vld [vmem:[#allocation3] sm:$0xff]
    %v49 = vld [vmem:[#allocation6] sm:$0xff]
    %v50 = vld [vmem:[#allocation6 + $0x8] sm:$0xff]
    %v51 = vld [vmem:[#allocation6 + $0x10] sm:$0xff]
    %v52 = vld [vmem:[#allocation6 + $0x18] sm:$0xff]
    %v53 = vld [vmem:[#allocation6 + $0x20] sm:$0xff]
    %v54 = vld [vmem:[#allocation6 + $0x28] sm:$0xff]
    %v55 = vld [vmem:[#allocation6 + $0x30] sm:$0xff]
    %v56 = vld [vmem:[#allocation6 + $0x38] sm:$0xff]
    %v57 = vld [vmem:[#allocation6 + $0x40] sm:$0xff]
    %v58 = vld [vmem:[#allocation6 + $0x48] sm:$0xff]
    %v59 = vld [vmem:[#allocation6 + $0x50] sm:$0xff]
    %v60 = vld [vmem:[#allocation6 + $0x58] sm:$0xff]
    %v61 = vld [vmem:[#allocation6 + $0x60] sm:$0xff]
    %v62 = vld [vmem:[#allocation6 + $0x68] sm:$0xff]
    %v63 = vld [vmem:[#allocation6 + $0x70] sm:$0xff]
    %v64 = vld [vmem:[#allocation6 + $0x78] sm:$0xff]
    %65 = vmatpush.msra.mxu0 %v64
    %66 = vmatpush.msra.mxu0 %v63
    %67 = vmatpush.msra.mxu0 %v62
    %68 = vmatpush.msra.mxu0 %v61
    %69 = vmatpush.msra.mxu0 %v60
    %70 = vmatpush.msra.mxu0 %v59
    %71 = vmatpush.msra.mxu0 %v58
    %72 = vmatpush.msra.mxu0 %v57
    %73 = vmatpush.msra.mxu0 %v56
    %74 = vmatpush.msra.mxu0 %v55
    %75 = vmatpush.msra.mxu0 %v54
    %76 = vmatpush.msra.mxu0 %v53
    %77 = vmatpush.msra.mxu0 %v52
    %78 = vmatpush.msra.mxu0 %v51
    %79 = vmatpush.msra.mxu0 %v50
    %80 = vmatpush.msra.mxu0 %v49
    %81 = vmatmul.f32.gmra.mxu0 %v48
    %v82 = vpop.f32.mrf.mxu0
    %v83 = vadd.f32 0.0, %v82
    %84 = vdwg.mxu0
    %v85 = vadd.f32 %v47, %v83
    %86 = vst [vmem:[#allocation2] sm:$0xff] %v85
    // Predicated region
    $region22: #{tpu_custom_call.1} parent=1 // pred_check
      %p87 = pneg %p42
    $region23: #{tpu_custom_call.1} parent=1 // pred_check_branch
      %89 = sbr.rel (%p87) target = $region25
    $region24: #{tpu_custom_call.1} parent=1 // pred_region
      %v90 = vld [vmem:[#allocation2] sm:$0xff]
      %91 = vst [vmem:[#allocation8] sm:$0xff] %v90
    $region25: #{tpu_custom_call.1} parent=1 // pred_fallthru
      _
    // Predicated region
    $region26: #{tpu_custom_call.1} parent=1 // pred_check
      _
    $region27: #{tpu_custom_call.1} parent=1 // pred_check_branch
      %93 = sbr.rel (0) target = $region29
    $region28: #{tpu_custom_call.1} parent=1 // pred_region
      %95 = vsyncadd [#allocation5], 0
      %s97 = sshll.u32 [#allocation8], 4
      %s98 = int_to_ptr.vmem [resolvable:$true] %s97
      %s99 = sshll.u32 %s2, 4
      %s100 = int_to_ptr.hbm [resolvable:$true] %s99
      %102 = dma.vmem_to_hbm [thread:$0]  %s98, 128, %s100, [#allocation5]
    $region29: #{tpu_custom_call.1} parent=1 // pred_fallthru
      _
    // Predicated region
    $region30: #{tpu_custom_call.1} parent=1 // pred_check
      _
    $region31: #{tpu_custom_call.1} parent=1 // pred_check_branch
      %104 = sbr.rel (0) target = $region33
    $region32: #{tpu_custom_call.1} parent=1 // pred_region
      %106 = dma.done [#allocation5], 128
    $region33: #{tpu_custom_call.1} parent=1 // pred_fallthru
      _
    %107 = vsyncpa [#allocation4], 1
    %108 = vsyncpa [#allocation7], 1
    %109 = vsyncpa [#allocation5], 1

</llo_original>
